<compile_context>
chip_gen: v7x
topology: tpu7x:2x2x1
jax: 0.10.0
libtpu: 0.0.40
codegen_flags: <defaults>
</compile_context>

<pallas_src>
import math
from functools import partial

import jax
import jax.numpy as jnp
from jax import lax
from jax.experimental import pallas as pl
from jax.experimental.pallas import tpu as pltpu


_LN_EPS = 1e-5


def _round_up(x, m):
    return ((x + m - 1) // m) * m


def _gelu_exact(x):
    # PyTorch F.gelu default: exact erf-based GELU.
    return 0.5 * x * (1.0 + lax.erf(x / math.sqrt(2.0)))


def transformer_update_kernel(
    feat_ref, upd_ref,
    w_in_ref, b_in_ref,
    w_ff1_ref, b_ff1_ref,
    w_ff2_ref, b_ff2_ref,
    gamma_ref, beta_ref,
    out_ref,
    *, d_real: int,
):
    mm_dtype = w_in_ref.dtype            # MXU matmul dtype (bf16 by default)
    d_pad = out_ref.shape[-1]

    # residual-in + "norm_in" linear (MXU in mm_dtype, f32 accumulation)
    x = feat_ref[...] + upd_ref[...]                                     # (tm, Dp) f32
    h = jnp.dot(x.astype(mm_dtype), w_in_ref[...],
                preferred_element_type=jnp.float32) + b_in_ref[...]      # (tm, Dp) f32

    # feed-forward: linear -> exact GELU -> linear (elementwise stays f32)
    f = jnp.dot(h.astype(mm_dtype), w_ff1_ref[...],
                preferred_element_type=jnp.float32) + b_ff1_ref[...]     # (tm, Fp)
    f = _gelu_exact(f)
    f = jnp.dot(f.astype(mm_dtype), w_ff2_ref[...],
                preferred_element_type=jnp.float32) + b_ff2_ref[...]     # (tm, Dp)

    # residual + LayerNorm over the *real* feature columns (f32, eps = 1e-5).
    # Padded feature columns are exactly zero by construction; mask anyway so
    # the centered values do not leak into the variance.
    y = h + f
    if d_real != d_pad:
        mask = lax.broadcasted_iota(jnp.int32, y.shape, 1) < d_real
        y = jnp.where(mask, y, 0.0)
    inv_d = 1.0 / float(d_real)
    mean = jnp.sum(y, axis=-1, keepdims=True) * inv_d
    cent = y - mean
    if d_real != d_pad:
        cent = jnp.where(mask, cent, 0.0)
    var = jnp.sum(cent * cent, axis=-1, keepdims=True) * inv_d
    y_norm = cent * lax.rsqrt(var + _LN_EPS)
    out_ref[...] = (y_norm * gamma_ref[...] + beta_ref[...]).astype(out_ref.dtype)


def transformer_update(feat, update, params, *, tm=None,
                       matmul_dtype=jnp.bfloat16, tm_max=1024):
    """feat, update: (..., in_dim).  Requires in_dim == out_dim (residual)."""
    orig_shape = feat.shape
    D = orig_shape[-1]
    F = params["w_ff1"].shape[0]
    assert params["w_ff2"].shape[0] == D, "residual requires in_dim == out_dim"

    feat2 = feat.reshape(-1, D)
    upd2 = update.reshape(-1, D)
    N = feat2.shape[0]

    # lane-dense padded feature dims (multiples of 128)
    Dp = _round_up(max(D, 1), 128)
    Fp = _round_up(max(F, 1), 128)

    # ---- explicit VMEM budget (per-generation aware) ------------------------
    try:
        vmem_cap = int(pltpu.get_tpu_info().vmem_capacity_bytes)
    except Exception:
        vmem_cap = 64 * 1024 * 1024      # conservative fallback (v7x size)
    vmem_cap = int(0.9 * vmem_cap)

    w_item = jnp.dtype(matmul_dtype).itemsize
    # weights + biases + gamma/beta (double-buffered by the BlockSpec pipeline)
    fixed_bytes = 2 * (Dp * Dp + 2 * Dp * Fp) * w_item + 2 * (4 * Dp + Fp) * 4
    # per-row cost: double-buffered f32 feat/upd/out tiles + live f32 temps
    per_row_bytes = 2 * 3 * Dp * 4 + 4 * (Fp + 6 * Dp)

    if tm is None:
        budget = vmem_cap // 2 - fixed_bytes
        tm = budget // per_row_bytes if budget > 0 else 8
        tm = max(8, min(tm_max, int(tm)))
        tm = (tm // 128) * 128 if tm >= 128 else (tm // 8) * 8

    # shrink the row tile for small token counts; keep >= 2 grid steps when
    # the problem allows it so both v7x TensorCores get work.
    tm_eff = max(8, min(int(tm), _round_up(N, 8)))
    tm_eff = (tm_eff // 8) * 8
    while (_round_up(N, tm_eff) // tm_eff) < 2 and tm_eff > 8:
        tm_eff = max(8, _round_up(tm_eff // 2, 8))
    N_pad = _round_up(N, tm_eff)
    grid = N_pad // tm_eff

    vmem_limit = int(1.5 * (fixed_bytes + per_row_bytes * tm_eff)) + (2 << 20)
    vmem_limit = min(max(vmem_limit, 32 * 1024 * 1024), vmem_cap)

    # ---- pad operands (rows to tile multiple, features to lane multiple) ----
    pad2 = lambda a, r, c: jnp.pad(a, ((0, r - a.shape[0]), (0, c - a.shape[1])))
    pad1 = lambda v, n: jnp.pad(v, (0, n - v.shape[0]))

    feat_p = pad2(feat2, N_pad, Dp)
    upd_p = pad2(upd2, N_pad, Dp)

    w_in_t = pad2(params["w_in"].T, Dp, Dp).astype(matmul_dtype)
    w_ff1_t = pad2(params["w_ff1"].T, Dp, Fp).astype(matmul_dtype)
    w_ff2_t = pad2(params["w_ff2"].T, Fp, Dp).astype(matmul_dtype)
    b_in = pad1(params["b_in"], Dp)[None, :].astype(jnp.float32)
    b_ff1 = pad1(params["b_ff1"], Fp)[None, :].astype(jnp.float32)
    b_ff2 = pad1(params["b_ff2"], Dp)[None, :].astype(jnp.float32)
    gamma = pad1(params["gamma"], Dp)[None, :].astype(jnp.float32)
    beta = pad1(params["beta"], Dp)[None, :].astype(jnp.float32)

    row_spec = pl.BlockSpec((tm_eff, Dp), lambda i: (i, 0))
    full = lambda shape: pl.BlockSpec(shape, lambda i: (0, 0))

    out = pl.pallas_call(
        partial(transformer_update_kernel, d_real=D),
        out_shape=jax.ShapeDtypeStruct((N_pad, Dp), feat.dtype),
        grid_spec=pltpu.PrefetchScalarGridSpec(
            num_scalar_prefetch=0,
            grid=(grid,),
            in_specs=[
                row_spec, row_spec,
                full((Dp, Dp)), full((1, Dp)),
                full((Dp, Fp)), full((1, Fp)),
                full((Fp, Dp)), full((1, Dp)),
                full((1, Dp)), full((1, Dp)),
            ],
            out_specs=row_spec,
        ),
        compiler_params=pltpu.CompilerParams(
            dimension_semantics=("parallel",),
            vmem_limit_bytes=vmem_limit,
        ),
    )(feat_p, upd_p, w_in_t, b_in, w_ff1_t, b_ff1, w_ff2_t, b_ff2, gamma, beta)

    return out[:N, :D].reshape(orig_shape)


def _reference(feat, update, params, matmul_dtype=jnp.float32):
    md = matmul_dtype
    dot = lambda a, b: jnp.dot(a.astype(md), b.astype(md),
                               preferred_element_type=jnp.float32)
    x = feat + update
    h = dot(x, params["w_in"].T) + params["b_in"]
    f = _gelu_exact(dot(h, params["w_ff1"].T) + params["b_ff1"])
    f = dot(f, params["w_ff2"].T) + params["b_ff2"]
    y = h + f
    mean = jnp.mean(y, axis=-1, keepdims=True)
    var = jnp.mean((y - mean) ** 2, axis=-1, keepdims=True)
    yn = (y - mean) * lax.rsqrt(var + _LN_EPS)
    return yn * params["gamma"] + params["beta"]


def make_params(key, in_dim, out_dim, ff_dim):
    ks = jax.random.split(key, 6)
    scale = 0.1
    return {
        "w_in": scale * jax.random.normal(ks[0], (in_dim, in_dim), jnp.float32),
        "b_in": scale * jax.random.normal(ks[1], (in_dim,), jnp.float32),
        "w_ff1": scale * jax.random.normal(ks[2], (ff_dim, in_dim), jnp.float32),
        "b_ff1": scale * jax.random.normal(ks[3], (ff_dim,), jnp.float32),
        "w_ff2": scale * jax.random.normal(ks[4], (out_dim, ff_dim), jnp.float32),
        "b_ff2": scale * jax.random.normal(ks[5], (out_dim,), jnp.float32),
        # LayerNorm affine (PyTorch init: ones / zeros)
        "gamma": jnp.ones((out_dim,), jnp.float32),
        "beta": jnp.zeros((out_dim,), jnp.float32),
    }


if __name__ == "__main__":
    in_dim = 32
    out_dim = 32                       # residual requires in_dim == out_dim
    ff_dim = 2 * in_dim                # module default: feed_forward_dim = 2 * in_dim
    batch, seq = 2, 8                  # 16 tokens total

    key = jax.random.PRNGKey(0)
    k_feat, k_upd, k_par = jax.random.split(key, 3)
    feat = jax.random.normal(k_feat, (batch, seq, in_dim), jnp.float32)
    update = jax.random.normal(k_upd, (batch, seq, in_dim), jnp.float32)
    params = make_params(k_par, in_dim, out_dim, ff_dim)

    out = transformer_update(feat, update, params)
    out = jax.block_until_ready(out)

    assert out.shape == (batch, seq, out_dim)
    assert bool(jnp.all(jnp.isfinite(out)))

    # Tight check against a reference that mirrors the kernel math
    # (bf16 matmul inputs, f32 accumulation, f32 elementwise / LayerNorm).
    ref_bf16 = _reference(feat, update, params, matmul_dtype=jnp.bfloat16)
    assert jnp.allclose(out, ref_bf16, atol=2e-3, rtol=2e-3), "mismatch vs bf16-matmul reference"

    # Loose check against the exact f32 PyTorch-equivalent math
    # (difference is only bf16 MXU input rounding).
    ref_f32 = _reference(feat, update, params, matmul_dtype=jnp.float32)
    assert jnp.allclose(out, ref_f32, atol=1e-1, rtol=0.0), "mismatch vs f32 reference"

    print("KERNEL_OK")
</pallas_src>

<mosaic_0001>
module attributes {stable_mosaic.version = 11 : i64} {
  func.func @transformer_update_kernel(%arg0: i32, %arg1: memref<8x128xf32, #tpu.memory_space<vmem>>, %arg2: memref<8x128xf32, #tpu.memory_space<vmem>>, %arg3: memref<128x128xbf16, #tpu.memory_space<vmem>>, %arg4: memref<1x128xf32, #tpu.memory_space<vmem>>, %arg5: memref<128x128xbf16, #tpu.memory_space<vmem>>, %arg6: memref<1x128xf32, #tpu.memory_space<vmem>>, %arg7: memref<128x128xbf16, #tpu.memory_space<vmem>>, %arg8: memref<1x128xf32, #tpu.memory_space<vmem>>, %arg9: memref<1x128xf32, #tpu.memory_space<vmem>>, %arg10: memref<1x128xf32, #tpu.memory_space<vmem>>, %arg11: memref<8x128xf32, #tpu.memory_space<vmem>>) attributes {dimension_semantics = [#tpu.dimension_semantics<parallel>], iteration_bounds = array<i64: 2>, scalar_prefetch = 0 : i64, scratch_operands = 0 : i64, tpu.core_type = #tpu.core_type<tc>, window_params = [{transform_indices = @transform_0, window_bounds = array<i64: 8, 128>}, {transform_indices = @transform_1, window_bounds = array<i64: 8, 128>}, {pipeline_mode = #tpu.pipeline_mode<synchronous>, transform_indices = @transform_2, window_bounds = array<i64: 128, 128>}, {pipeline_mode = #tpu.pipeline_mode<synchronous>, transform_indices = @transform_3, window_bounds = array<i64: 1, 128>}, {pipeline_mode = #tpu.pipeline_mode<synchronous>, transform_indices = @transform_4, window_bounds = array<i64: 128, 128>}, {pipeline_mode = #tpu.pipeline_mode<synchronous>, transform_indices = @transform_5, window_bounds = array<i64: 1, 128>}, {pipeline_mode = #tpu.pipeline_mode<synchronous>, transform_indices = @transform_6, window_bounds = array<i64: 128, 128>}, {pipeline_mode = #tpu.pipeline_mode<synchronous>, transform_indices = @transform_7, window_bounds = array<i64: 1, 128>}, {pipeline_mode = #tpu.pipeline_mode<synchronous>, transform_indices = @transform_8, window_bounds = array<i64: 1, 128>}, {pipeline_mode = #tpu.pipeline_mode<synchronous>, transform_indices = @transform_9, window_bounds = array<i64: 1, 128>}, {transform_indices = @transform_10, window_bounds = array<i64: 8, 128>}]} {
    %c0 = arith.constant 0 : index
    %c0_0 = arith.constant 0 : index
    %0 = vector.load %arg1[%c0, %c0_0] : memref<8x128xf32, #tpu.memory_space<vmem>>, vector<8x128xf32>
    %c0_1 = arith.constant 0 : index
    %c0_2 = arith.constant 0 : index
    %1 = vector.load %arg2[%c0_1, %c0_2] : memref<8x128xf32, #tpu.memory_space<vmem>>, vector<8x128xf32>
    %2 = arith.addf %0, %1 : vector<8x128xf32>
    %3 = arith.truncf %2 : vector<8x128xf32> to vector<8x128xbf16>
    %c0_3 = arith.constant 0 : index
    %c0_4 = arith.constant 0 : index
    %4 = vector.load %arg3[%c0_3, %c0_4] : memref<128x128xbf16, #tpu.memory_space<vmem>>, vector<128x128xbf16>
    %cst = arith.constant dense<0.000000e+00> : vector<8x128xf32>
    %5 = tpu.matmul %3, %4, %cst {dimension_numbers = #tpu.dot_dimension_numbers<[1], [0], [0], [1], [0, 0, 1, 1], [], []>} : vector<8x128xbf16>, vector<128x128xbf16>, vector<8x128xf32> -> vector<8x128xf32>
    %c0_5 = arith.constant 0 : index
    %c0_6 = arith.constant 0 : index
    %6 = vector.load %arg4[%c0_5, %c0_6] : memref<1x128xf32, #tpu.memory_space<vmem>>, vector<1x128xf32>
    %7 = vector.broadcast %6 : vector<1x128xf32> to vector<8x128xf32>
    %8 = arith.addf %5, %7 : vector<8x128xf32>
    %9 = arith.truncf %8 : vector<8x128xf32> to vector<8x128xbf16>
    %c0_7 = arith.constant 0 : index
    %c0_8 = arith.constant 0 : index
    %10 = vector.load %arg5[%c0_7, %c0_8] : memref<128x128xbf16, #tpu.memory_space<vmem>>, vector<128x128xbf16>
    %cst_9 = arith.constant dense<0.000000e+00> : vector<8x128xf32>
    %11 = tpu.matmul %9, %10, %cst_9 {dimension_numbers = #tpu.dot_dimension_numbers<[1], [0], [0], [1], [0, 0, 1, 1], [], []>} : vector<8x128xbf16>, vector<128x128xbf16>, vector<8x128xf32> -> vector<8x128xf32>
    %c0_10 = arith.constant 0 : index
    %c0_11 = arith.constant 0 : index
    %12 = vector.load %arg6[%c0_10, %c0_11] : memref<1x128xf32, #tpu.memory_space<vmem>>, vector<1x128xf32>
    %13 = vector.broadcast %12 : vector<1x128xf32> to vector<8x128xf32>
    %14 = arith.addf %11, %13 : vector<8x128xf32>
    %cst_12 = arith.constant 5.000000e-01 : f32
    %15 = vector.broadcast %cst_12 : f32 to vector<8x128xf32>
    %16 = arith.mulf %15, %14 : vector<8x128xf32>
    %cst_13 = arith.constant 1.41421354 : f32
    %17 = vector.broadcast %cst_13 : f32 to vector<8x128xf32>
    %18 = arith.divf %14, %17 : vector<8x128xf32>
    %19 = math.erf %18 : vector<8x128xf32>
    %cst_14 = arith.constant 1.000000e+00 : f32
    %20 = vector.broadcast %cst_14 : f32 to vector<8x128xf32>
    %21 = arith.addf %20, %19 : vector<8x128xf32>
    %22 = arith.mulf %16, %21 : vector<8x128xf32>
    %23 = arith.truncf %22 : vector<8x128xf32> to vector<8x128xbf16>
    %c0_15 = arith.constant 0 : index
    %c0_16 = arith.constant 0 : index
    %24 = vector.load %arg7[%c0_15, %c0_16] : memref<128x128xbf16, #tpu.memory_space<vmem>>, vector<128x128xbf16>
    %cst_17 = arith.constant dense<0.000000e+00> : vector<8x128xf32>
    %25 = tpu.matmul %23, %24, %cst_17 {dimension_numbers = #tpu.dot_dimension_numbers<[1], [0], [0], [1], [0, 0, 1, 1], [], []>} : vector<8x128xbf16>, vector<128x128xbf16>, vector<8x128xf32> -> vector<8x128xf32>
    %c0_18 = arith.constant 0 : index
    %c0_19 = arith.constant 0 : index
    %26 = vector.load %arg8[%c0_18, %c0_19] : memref<1x128xf32, #tpu.memory_space<vmem>>, vector<1x128xf32>
    %27 = vector.broadcast %26 : vector<1x128xf32> to vector<8x128xf32>
    %28 = arith.addf %25, %27 : vector<8x128xf32>
    %29 = arith.addf %8, %28 : vector<8x128xf32>
    %30 = tpu.iota {dimensions = array<i32: 1>} : vector<8x128xi32>
    %c32_i32 = arith.constant 32 : i32
    %31 = vector.broadcast %c32_i32 : i32 to vector<8x128xi32>
    %32 = arith.cmpi slt, %30, %31 : vector<8x128xi32>
    %cst_20 = arith.constant 0.000000e+00 : f32
    %33 = vector.broadcast %cst_20 : f32 to vector<8x128xf32>
    %34 = arith.select %32, %29, %33 : vector<8x128xi1>, vector<8x128xf32>
    %cst_21 = arith.constant dense<0.000000e+00> : vector<8xf32>
    %35 = vector.multi_reduction <add>, %34, %cst_21 [1] : vector<8x128xf32> to vector<8xf32>
    %36 = vector.shape_cast %35 : vector<8xf32> to vector<8x1xf32>
    %cst_22 = arith.constant 3.125000e-02 : f32
    %37 = vector.broadcast %cst_22 : f32 to vector<8x1xf32>
    %38 = arith.mulf %36, %37 : vector<8x1xf32>
    %39 = vector.broadcast %38 : vector<8x1xf32> to vector<8x128xf32>
    %40 = arith.subf %34, %39 : vector<8x128xf32>
    %cst_23 = arith.constant 0.000000e+00 : f32
    %41 = vector.broadcast %cst_23 : f32 to vector<8x128xf32>
    %42 = arith.select %32, %40, %41 : vector<8x128xi1>, vector<8x128xf32>
    %43 = arith.mulf %42, %42 : vector<8x128xf32>
    %cst_24 = arith.constant dense<0.000000e+00> : vector<8xf32>
    %44 = vector.multi_reduction <add>, %43, %cst_24 [1] : vector<8x128xf32> to vector<8xf32>
    %45 = vector.shape_cast %44 : vector<8xf32> to vector<8x1xf32>
    %cst_25 = arith.constant 3.125000e-02 : f32
    %46 = vector.broadcast %cst_25 : f32 to vector<8x1xf32>
    %47 = arith.mulf %45, %46 : vector<8x1xf32>
    %cst_26 = arith.constant 9.99999974E-6 : f32
    %48 = vector.broadcast %cst_26 : f32 to vector<8x1xf32>
    %49 = arith.addf %47, %48 : vector<8x1xf32>
    %50 = math.rsqrt %49 : vector<8x1xf32>
    %51 = vector.broadcast %50 : vector<8x1xf32> to vector<8x128xf32>
    %52 = arith.mulf %42, %51 : vector<8x128xf32>
    %c0_27 = arith.constant 0 : index
    %c0_28 = arith.constant 0 : index
    %53 = vector.load %arg9[%c0_27, %c0_28] : memref<1x128xf32, #tpu.memory_space<vmem>>, vector<1x128xf32>
    %54 = vector.broadcast %53 : vector<1x128xf32> to vector<8x128xf32>
    %55 = arith.mulf %52, %54 : vector<8x128xf32>
    %c0_29 = arith.constant 0 : index
    %c0_30 = arith.constant 0 : index
    %56 = vector.load %arg10[%c0_29, %c0_30] : memref<1x128xf32, #tpu.memory_space<vmem>>, vector<1x128xf32>
    %57 = vector.broadcast %56 : vector<1x128xf32> to vector<8x128xf32>
    %58 = arith.addf %55, %57 : vector<8x128xf32>
    %c0_31 = arith.constant 0 : index
    %c0_32 = arith.constant 0 : index
    %59 = vector.load %arg11[%c0_31, %c0_32] : memref<8x128xf32, #tpu.memory_space<vmem>>, vector<8x128xf32>
    tpu.vector_store %arg11[%c0_31, %c0_32], %58 {strides = array<i32>} : memref<8x128xf32, #tpu.memory_space<vmem>>, vector<8x128xf32>,
    return
  }
  func.func @transform_0(%arg0: i32) -> (i32, i32) {
    %c0_i32 = arith.constant 0 : i32
    %c0_i32_0 = arith.constant 0 : i32
    return %arg0, %c0_i32 : i32, i32
  }
  func.func @transform_1(%arg0: i32) -> (i32, i32) {
    %c0_i32 = arith.constant 0 : i32
    %c0_i32_0 = arith.constant 0 : i32
    return %arg0, %c0_i32 : i32, i32
  }
  func.func @transform_2(%arg0: i32) -> (i32, i32) {
    %c0_i32 = arith.constant 0 : i32
    %c0_i32_0 = arith.constant 0 : i32
    %c0_i32_1 = arith.constant 0 : i32
    return %c0_i32, %c0_i32_0 : i32, i32
  }
  func.func @transform_3(%arg0: i32) -> (i32, i32) {
    %c0_i32 = arith.constant 0 : i32
    %c0_i32_0 = arith.constant 0 : i32
    %c0_i32_1 = arith.constant 0 : i32
    return %c0_i32, %c0_i32_0 : i32, i32
  }
  func.func @transform_4(%arg0: i32) -> (i32, i32) {
    %c0_i32 = arith.constant 0 : i32
    %c0_i32_0 = arith.constant 0 : i32
    %c0_i32_1 = arith.constant 0 : i32
    return %c0_i32, %c0_i32_0 : i32, i32
  }
  func.func @transform_5(%arg0: i32) -> (i32, i32) {
    %c0_i32 = arith.constant 0 : i32
    %c0_i32_0 = arith.constant 0 : i32
    %c0_i32_1 = arith.constant 0 : i32
    return %c0_i32, %c0_i32_0 : i32, i32
  }
  func.func @transform_6(%arg0: i32) -> (i32, i32) {
    %c0_i32 = arith.constant 0 : i32
    %c0_i32_0 = arith.constant 0 : i32
    %c0_i32_1 = arith.constant 0 : i32
    return %c0_i32, %c0_i32_0 : i32, i32
  }
  func.func @transform_7(%arg0: i32) -> (i32, i32) {
    %c0_i32 = arith.constant 0 : i32
    %c0_i32_0 = arith.constant 0 : i32
    %c0_i32_1 = arith.constant 0 : i32
    return %c0_i32, %c0_i32_0 : i32, i32
  }
  func.func @transform_8(%arg0: i32) -> (i32, i32) {
    %c0_i32 = arith.constant 0 : i32
    %c0_i32_0 = arith.constant 0 : i32
    %c0_i32_1 = arith.constant 0 : i32
    return %c0_i32, %c0_i32_0 : i32, i32
  }
  func.func @transform_9(%arg0: i32) -> (i32, i32) {
    %c0_i32 = arith.constant 0 : i32
    %c0_i32_0 = arith.constant 0 : i32
    %c0_i32_1 = arith.constant 0 : i32
    return %c0_i32, %c0_i32_0 : i32, i32
  }
  func.func @transform_10(%arg0: i32) -> (i32, i32) {
    %c0_i32 = arith.constant 0 : i32
    %c0_i32_0 = arith.constant 0 : i32
    return %arg0, %c0_i32 : i32, i32
  }
}

</mosaic_0001>

<llo_original>
// kernel: tpu_custom_call.1
$region0: #{tpu_custom_call.1}
  #allocation0 [shape = 'u32[]', space=smem, size = 0x4, offset = 0x4, fixed_abs, tag = 'smem constant byte address 0x4 - core index']
  #allocation1 [shape = 'u32[144,128]{1,0:T(1,128)}', space=vmem, size = 0x12000, scoped, tag = 'internal scratch']
  %s0 = inlined_call_operand.hbm [shape: f32[16,128], index: 0, kind: input, shape index: {}]
  %s1 = inlined_call_operand.hbm [shape: f32[16,128], index: 1, kind: input, shape index: {}]
  %s2 = inlined_call_operand.hbm [shape: bf16[128,128], index: 2, kind: input, shape index: {}]
  %s3 = inlined_call_operand.vmem [shape: f32[1,128], index: 3, kind: input, shape index: {}]
  %s4 = inlined_call_operand.hbm [shape: bf16[128,128], index: 4, kind: input, shape index: {}]
  %s5 = inlined_call_operand.vmem [shape: f32[1,128], index: 5, kind: input, shape index: {}]
  %s6 = inlined_call_operand.hbm [shape: bf16[128,128], index: 6, kind: input, shape index: {}]
  %s7 = inlined_call_operand.vmem [shape: f32[1,128], index: 7, kind: input, shape index: {}]
  %s8 = inlined_call_operand.vmem [shape: f32[1,128], index: 8, kind: input, shape index: {}]
  %s9 = inlined_call_operand.vmem [shape: f32[1,128], index: 9, kind: input, shape index: {}]
  %s10 = inlined_call_operand.hbm [shape: f32[16,128], index: 10, kind: output, shape index: {}]
  %s11 = sld [smem:[#allocation0]]
  $region93: #{tpu_custom_call.1} parent=0
    _
  %s13 = ssub.s32 1, %s11
  %s14 = scalar_select 0, %s13, %s11
  $region1: #{tpu_custom_call.1} parent=0
    #allocation2 [shape = 'u8[8192]{0}', space=vmem, size = 0x2000, scoped, tag = 'input window, operand 0']
    #allocation3 [shape = 's32[2]{0}', space=sflag, size = 0x8, scoped, tag = 'scoped memory for tpu_custom_call.1']
    #allocation4 [shape = 's32[2]{0}', space=sflag, size = 0x8, scoped, tag = 'scoped memory for tpu_custom_call.1']
    #allocation5 [shape = 'u8[8192]{0}', space=vmem, size = 0x2000, scoped, tag = 'input window, operand 1']
    #allocation6 [shape = 's32[2]{0}', space=sflag, size = 0x8, scoped, tag = 'scoped memory for tpu_custom_call.1']
    #allocation7 [shape = 'u8[32768]{0}', space=vmem, size = 0x8000, scoped, tag = 'input window, operand 2, single buffered']
    #allocation8 [shape = 'u8[32768]{0}', space=vmem, size = 0x8000, scoped, tag = 'input window, operand 4, single buffered']
    #allocation9 [shape = 's32[1]{0}', space=sflag, size = 0x4, scoped, tag = 'scoped memory for tpu_custom_call.1']
    #allocation10 [shape = 'u8[32768]{0}', space=vmem, size = 0x8000, scoped, tag = 'input window, operand 6, single buffered']
    #allocation11 [shape = 'u8[8192]{0}', space=vmem, size = 0x2000, scoped, tag = 'output window, operand 0']
    %15 = vsyncpa [#allocation3], 0
    %s16 = scalar_lea.sflag [#allocation3], 1
    %17 = vsyncpa %s16, 0
    %18 = vsyncpa [#allocation6], 0
    %s19 = scalar_lea.sflag [#allocation6], 1
    %20 = vsyncpa %s19, 0
    %21 = vsyncpa [#allocation9], 0
    %22 = vsyncpa [#allocation4], 0
    %s23 = scalar_lea.sflag [#allocation4], 1
    %24 = vsyncpa %s23, 0
    loop: start=0, step=1, limit=4
    $region2: #{tpu_custom_call.1} parent=1 // loop_pre_header
      _
    $region3: #{tpu_custom_call.1} parent=1 // loop_header
      %s26 = sphi 0, %s30
      %p27 = scmp.ge.s32.totalorder %s26, 4
      %s36 = sphi 0, %s38
      %s39 = sphi 0, %s36
      %s40 = sphi 0, %s39
      %s56 = sphi 0, %s40
      %s62 = sphi 0, %s64
      %s65 = sphi 0, %s62
      %s66 = sphi 0, %s65
      %s82 = sphi 0, %s66
      %s86 = sphi 0, %s86
      %s88 = sphi 0, %s86
      %s89 = sphi 0, %s88
      %s103 = sphi 0, %s89
      %s107 = sphi 0, %s107
      %s109 = sphi 0, %s107
      %s110 = sphi 0, %s109
      %s124 = sphi 0, %s110
      %s128 = sphi 0, %s128
      %s130 = sphi 0, %s128
      %s131 = sphi 0, %s130
      %s145 = sphi 0, %s131
      %s149 = sphi 0, %s149
      %s151 = sphi 0, %s149
      %s152 = sphi 0, %s151
      %s166 = sphi 0, %s152
      %s170 = sphi 0, %s170
      %s172 = sphi 0, %s170
      %s173 = sphi 0, %s172
      %s187 = sphi 0, %s173
      %s191 = sphi 0, %s191
      %s193 = sphi 0, %s191
      %s194 = sphi 0, %s193
      %s208 = sphi 0, %s194
      %s212 = sphi 0, %s212
      %s214 = sphi 0, %s212
      %s215 = sphi 0, %s214
      %s229 = sphi 0, %s215
      %s233 = sphi 0, %s233
      %s235 = sphi 0, %s233
      %s236 = sphi 0, %s235
      %s250 = sphi 0, %s236
      %s256 = sphi 0, %s258
      %s259 = sphi 0, %s256
      %s260 = sphi 0, %s259
      %s276 = sphi 0, %s260
    $region4: #{tpu_custom_call.1} parent=1 // loop_header_branch
      %29 = sbr.rel (%p27) target = $region8
    $region5: #{tpu_custom_call.1} parent=1 // loop_body
      %s31 = ssub.s32 %s26, 1
      %s32 = ssub.s32 %s26, 2
      %s33 = sadd.s32 %s26, 1
      %s34 = ssub.s32 %s26, %s33
      %p35 = scmp.eq.s32.totalorder %s34, 0
      %s37 = sadd.s32 %s36, 1
      %s38 = scalar_select %p35, %s36, %s37
      %p41 = pneg %p35
      %p42 = scmp.eq.s32.totalorder %s26, 1
      %p43 = por %p41, %p42
      %p44 = scmp.ne.s32.totalorder %s36, %s39
      %p45 = scmp.eq.s32.totalorder %s26, 0
      %p46 = por %p44, %p45
      %p47 = scmp.ne.s32.totalorder %s36, %s39
      %p48 = scmp.eq.s32.totalorder %s31, 1
      %p49 = por %p47, %p48
      %p50 = scmp.ne.s32.totalorder %s39, %s40
      %p51 = scmp.eq.s32.totalorder %s31, 0
      %p52 = por %p50, %p51
      %p53 = scmp.ne.s32.totalorder %s39, %s40
      %p54 = scmp.eq.s32.totalorder %s32, 1
      %p55 = por %p53, %p54
      %p57 = scmp.ne.s32.totalorder %s40, %s56
      %p58 = scmp.eq.s32.totalorder %s32, 0
      %p59 = por %p57, %p58
      %s60 = ssub.s32 %s26, %s33
      %p61 = scmp.eq.s32.totalorder %s60, 0
      %s63 = sadd.s32 %s62, 1
      %s64 = scalar_select %p61, %s62, %s63
      %p67 = pneg %p61
      %p68 = scmp.eq.s32.totalorder %s26, 1
      %p69 = por %p67, %p68
      %p70 = scmp.ne.s32.totalorder %s62, %s65
      %p71 = scmp.eq.s32.totalorder %s26, 0
      %p72 = por %p70, %p71
      %p73 = scmp.ne.s32.totalorder %s62, %s65
      %p74 = scmp.eq.s32.totalorder %s31, 1
      %p75 = por %p73, %p74
      %p76 = scmp.ne.s32.totalorder %s65, %s66
      %p77 = scmp.eq.s32.totalorder %s31, 0
      %p78 = por %p76, %p77
      %p79 = scmp.ne.s32.totalorder %s65, %s66
      %p80 = scmp.eq.s32.totalorder %s32, 1
      %p81 = por %p79, %p80
      %p83 = scmp.ne.s32.totalorder %s66, %s82
      %p84 = scmp.eq.s32.totalorder %s32, 0
      %p85 = por %p83, %p84
      %s87 = sadd.s32 %s86, 1
      %p90 = scmp.eq.s32.totalorder %s26, 1
      %p91 = scmp.ne.s32.totalorder %s86, %s88
      %p92 = scmp.eq.s32.totalorder %s26, 0
      %p93 = por %p91, %p92
      %p94 = scmp.ne.s32.totalorder %s86, %s88
      %p95 = scmp.eq.s32.totalorder %s31, 1
      %p96 = por %p94, %p95
      %p97 = scmp.ne.s32.totalorder %s88, %s89
      %p98 = scmp.eq.s32.totalorder %s31, 0
      %p99 = por %p97, %p98
      %p100 = scmp.ne.s32.totalorder %s88, %s89
      %p101 = scmp.eq.s32.totalorder %s32, 1
      %p102 = por %p100, %p101
      %p104 = scmp.ne.s32.totalorder %s89, %s103
      %p105 = scmp.eq.s32.totalorder %s32, 0
      %p106 = por %p104, %p105
      %s108 = sadd.s32 %s107, 1
      %p111 = scmp.eq.s32.totalorder %s26, 1
      %p112 = scmp.ne.s32.totalorder %s107, %s109
      %p113 = scmp.eq.s32.totalorder %s26, 0
      %p114 = por %p112, %p113
      %p115 = scmp.ne.s32.totalorder %s107, %s109
      %p116 = scmp.eq.s32.totalorder %s31, 1
      %p117 = por %p115, %p116
      %p118 = scmp.ne.s32.totalorder %s109, %s110
      %p119 = scmp.eq.s32.totalorder %s31, 0
      %p120 = por %p118, %p119
      %p121 = scmp.ne.s32.totalorder %s109, %s110
      %p122 = scmp.eq.s32.totalorder %s32, 1
      %p123 = por %p121, %p122
      %p125 = scmp.ne.s32.totalorder %s110, %s124
      %p126 = scmp.eq.s32.totalorder %s32, 0
      %p127 = por %p125, %p126
      %s129 = sadd.s32 %s128, 1
      %p132 = scmp.eq.s32.totalorder %s26, 1
      %p133 = scmp.ne.s32.totalorder %s128, %s130
      %p134 = scmp.eq.s32.totalorder %s26, 0
      %p135 = por %p133, %p134
      %p136 = scmp.ne.s32.totalorder %s128, %s130
      %p137 = scmp.eq.s32.totalorder %s31, 1
      %p138 = por %p136, %p137
      %p139 = scmp.ne.s32.totalorder %s130, %s131
      %p140 = scmp.eq.s32.totalorder %s31, 0
      %p141 = por %p139, %p140
      %p142 = scmp.ne.s32.totalorder %s130, %s131
      %p143 = scmp.eq.s32.totalorder %s32, 1
      %p144 = por %p142, %p143
      %p146 = scmp.ne.s32.totalorder %s131, %s145
      %p147 = scmp.eq.s32.totalorder %s32, 0
      %p148 = por %p146, %p147
      %s150 = sadd.s32 %s149, 1
      %p153 = scmp.eq.s32.totalorder %s26, 1
      %p154 = scmp.ne.s32.totalorder %s149, %s151
      %p155 = scmp.eq.s32.totalorder %s26, 0
      %p156 = por %p154, %p155
      %p157 = scmp.ne.s32.totalorder %s149, %s151
      %p158 = scmp.eq.s32.totalorder %s31, 1
      %p159 = por %p157, %p158
      %p160 = scmp.ne.s32.totalorder %s151, %s152
      %p161 = scmp.eq.s32.totalorder %s31, 0
      %p162 = por %p160, %p161
      %p163 = scmp.ne.s32.totalorder %s151, %s152
      %p164 = scmp.eq.s32.totalorder %s32, 1
      %p165 = por %p163, %p164
      %p167 = scmp.ne.s32.totalorder %s152, %s166
      %p168 = scmp.eq.s32.totalorder %s32, 0
      %p169 = por %p167, %p168
      %s171 = sadd.s32 %s170, 1
      %p174 = scmp.eq.s32.totalorder %s26, 1
      %p175 = scmp.ne.s32.totalorder %s170, %s172
      %p176 = scmp.eq.s32.totalorder %s26, 0
      %p177 = por %p175, %p176
      %p178 = scmp.ne.s32.totalorder %s170, %s172
      %p179 = scmp.eq.s32.totalorder %s31, 1
      %p180 = por %p178, %p179
      %p181 = scmp.ne.s32.totalorder %s172, %s173
      %p182 = scmp.eq.s32.totalorder %s31, 0
      %p183 = por %p181, %p182
      %p184 = scmp.ne.s32.totalorder %s172, %s173
      %p185 = scmp.eq.s32.totalorder %s32, 1
      %p186 = por %p184, %p185
      %p188 = scmp.ne.s32.totalorder %s173, %s187
      %p189 = scmp.eq.s32.totalorder %s32, 0
      %p190 = por %p188, %p189
      %s192 = sadd.s32 %s191, 1
      %p195 = scmp.eq.s32.totalorder %s26, 1
      %p196 = scmp.ne.s32.totalorder %s191, %s193
      %p197 = scmp.eq.s32.totalorder %s26, 0
      %p198 = por %p196, %p197
      %p199 = scmp.ne.s32.totalorder %s191, %s193
      %p200 = scmp.eq.s32.totalorder %s31, 1
      %p201 = por %p199, %p200
      %p202 = scmp.ne.s32.totalorder %s193, %s194
      %p203 = scmp.eq.s32.totalorder %s31, 0
      %p204 = por %p202, %p203
      %p205 = scmp.ne.s32.totalorder %s193, %s194
      %p206 = scmp.eq.s32.totalorder %s32, 1
      %p207 = por %p205, %p206
      %p209 = scmp.ne.s32.totalorder %s194, %s208
      %p210 = scmp.eq.s32.totalorder %s32, 0
      %p211 = por %p209, %p210
      %s213 = sadd.s32 %s212, 1
      %p216 = scmp.eq.s32.totalorder %s26, 1
      %p217 = scmp.ne.s32.totalorder %s212, %s214
      %p218 = scmp.eq.s32.totalorder %s26, 0
      %p219 = por %p217, %p218
      %p220 = scmp.ne.s32.totalorder %s212, %s214
      %p221 = scmp.eq.s32.totalorder %s31, 1
      %p222 = por %p220, %p221
      %p223 = scmp.ne.s32.totalorder %s214, %s215
      %p224 = scmp.eq.s32.totalorder %s31, 0
      %p225 = por %p223, %p224
      %p226 = scmp.ne.s32.totalorder %s214, %s215
      %p227 = scmp.eq.s32.totalorder %s32, 1
      %p228 = por %p226, %p227
      %p230 = scmp.ne.s32.totalorder %s215, %s229
      %p231 = scmp.eq.s32.totalorder %s32, 0
      %p232 = por %p230, %p231
      %s234 = sadd.s32 %s233, 1
      %p237 = scmp.eq.s32.totalorder %s26, 1
      %p238 = scmp.ne.s32.totalorder %s233, %s235
      %p239 = scmp.eq.s32.totalorder %s26, 0
      %p240 = por %p238, %p239
      %p241 = scmp.ne.s32.totalorder %s233, %s235
      %p242 = scmp.eq.s32.totalorder %s31, 1
      %p243 = por %p241, %p242
      %p244 = scmp.ne.s32.totalorder %s235, %s236
      %p245 = scmp.eq.s32.totalorder %s31, 0
      %p246 = por %p244, %p245
      %p247 = scmp.ne.s32.totalorder %s235, %s236
      %p248 = scmp.eq.s32.totalorder %s32, 1
      %p249 = por %p247, %p248
      %p251 = scmp.ne.s32.totalorder %s236, %s250
      %p252 = scmp.eq.s32.totalorder %s32, 0
      %p253 = por %p251, %p252
      %s254 = ssub.s32 %s26, %s33
      %p255 = scmp.eq.s32.totalorder %s254, 0
      %s257 = sadd.s32 %s256, 1
      %s258 = scalar_select %p255, %s256, %s257
      %p261 = pneg %p255
      %p262 = scmp.eq.s32.totalorder %s26, 1
      %p263 = por %p261, %p262
      %p264 = scmp.ne.s32.totalorder %s256, %s259
      %p265 = scmp.eq.s32.totalorder %s26, 0
      %p266 = por %p264, %p265
      %p267 = scmp.ne.s32.totalorder %s256, %s259
      %p268 = scmp.eq.s32.totalorder %s31, 1
      %p269 = por %p267, %p268
      %p270 = scmp.ne.s32.totalorder %s259, %s260
      %p271 = scmp.eq.s32.totalorder %s31, 0
      %p272 = por %p270, %p271
      %p273 = scmp.ne.s32.totalorder %s259, %s260
      %p274 = scmp.eq.s32.totalorder %s32, 1
      %p275 = por %p273, %p274
      %p277 = scmp.ne.s32.totalorder %s260, %s276
      %p278 = scmp.eq.s32.totalorder %s32, 0
      %p279 = por %p277, %p278
      %p280 = scmp.le.s32.totalorder 1, %s26
      %p281 = scmp.lt.s32.totalorder %s26, 3
      %p282 = pnand %p280, %p281
      %p283 = pneg %p282
      // Predicated region
      $region9: #{tpu_custom_call.1} parent=5 // pred_check
        _
      $region10: #{tpu_custom_call.1} parent=5 // pred_check_branch
        %285 = sbr.rel (%p282) target = $region12
      $region11: #{tpu_custom_call.1} parent=5 // pred_region
        %s286 = ssub.s32 %s26, 1
        // Predicated region
        $region13: #{tpu_custom_call.1} parent=11 // pred_check
          %p287 = pneg %p99
        $region14: #{tpu_custom_call.1} parent=11 // pred_check_branch
          %289 = sbr.rel (%p287) target = $region16
        $region15: #{tpu_custom_call.1} parent=11 // pred_region
          %s291 = ssub.s32 1024, 1024
          %292 = vsyncadd [#allocation6], %s291
          %s293 = sshll.u32 [#allocation7], 4
          %s294 = int_to_ptr.vmem [resolvable:$true] %s293
          %299 = dma.hbm_to_vmem [thread:$0]  %s2, 1024, %s294, [#allocation6], 64, 64, 4
        $region16: #{tpu_custom_call.1} parent=11 // pred_fallthru
          _
        // Predicated region
        $region17: #{tpu_custom_call.1} parent=11 // pred_check
          %p300 = pneg %p120
        $region18: #{tpu_custom_call.1} parent=11 // pred_check_branch
          %302 = sbr.rel (%p300) target = $region20
        $region19: #{tpu_custom_call.1} parent=11 // pred_region
          _
        $region20: #{tpu_custom_call.1} parent=11 // pred_fallthru
          _
        // Predicated region
        $region21: #{tpu_custom_call.1} parent=11 // pred_check
          %p303 = pneg %p141
        $region22: #{tpu_custom_call.1} parent=11 // pred_check_branch
          %305 = sbr.rel (%p303) target = $region24
        $region23: #{tpu_custom_call.1} parent=11 // pred_region
          %s307 = ssub.s32 1024, 1024
          %308 = vsyncadd [#allocation9], %s307
          %s309 = sshll.u32 [#allocation8], 4
          %s310 = int_to_ptr.vmem [resolvable:$true] %s309
          %315 = dma.hbm_to_vmem [thread:$0]  %s4, 1024, %s310, [#allocation9], 64, 64, 4
        $region24: #{tpu_custom_call.1} parent=11 // pred_fallthru
          _
        // Predicated region
        $region25: #{tpu_custom_call.1} parent=11 // pred_check
          %p316 = pneg %p162
        $region26: #{tpu_custom_call.1} parent=11 // pred_check_branch
          %318 = sbr.rel (%p316) target = $region28
        $region27: #{tpu_custom_call.1} parent=11 // pred_region
          _
        $region28: #{tpu_custom_call.1} parent=11 // pred_fallthru
          _
        // Predicated region
        $region29: #{tpu_custom_call.1} parent=11 // pred_check
          %p319 = pneg %p183
        $region30: #{tpu_custom_call.1} parent=11 // pred_check_branch
          %321 = sbr.rel (%p319) target = $region32
        $region31: #{tpu_custom_call.1} parent=11 // pred_region
          %s323 = ssub.s32 1024, 1024
          %324 = vsyncadd [#allocation9], %s323
          %s325 = sshll.u32 [#allocation10], 4
          %s326 = int_to_ptr.vmem [resolvable:$true] %s325
          %331 = dma.hbm_to_vmem [thread:$0]  %s6, 1024, %s326, [#allocation9], 64, 64, 4
        $region32: #{tpu_custom_call.1} parent=11 // pred_fallthru
          _
        // Predicated region
        $region33: #{tpu_custom_call.1} parent=11 // pred_check
          %p332 = pneg %p204
        $region34: #{tpu_custom_call.1} parent=11 // pred_check_branch
          %334 = sbr.rel (%p332) target = $region36
        $region35: #{tpu_custom_call.1} parent=11 // pred_region
          _
        $region36: #{tpu_custom_call.1} parent=11 // pred_fallthru
          _
        // Predicated region
        $region37: #{tpu_custom_call.1} parent=11 // pred_check
          %p335 = pneg %p225
        $region38: #{tpu_custom_call.1} parent=11 // pred_check_branch
          %337 = sbr.rel (%p335) target = $region40
        $region39: #{tpu_custom_call.1} parent=11 // pred_region
          _
        $region40: #{tpu_custom_call.1} parent=11 // pred_fallthru
          _
        // Predicated region
        $region41: #{tpu_custom_call.1} parent=11 // pred_check
          %p338 = pneg %p246
        $region42: #{tpu_custom_call.1} parent=11 // pred_check_branch
          %340 = sbr.rel (%p338) target = $region44
        $region43: #{tpu_custom_call.1} parent=11 // pred_region
          _
        $region44: #{tpu_custom_call.1} parent=11 // pred_fallthru
          _
      $region12: #{tpu_custom_call.1} parent=5 // pred_fallthru
        _
      %p341 = scmp.lt.s32.totalorder %s26, 2
      // Predicated region
      $region45: #{tpu_custom_call.1} parent=5 // pred_check
        %p342 = pneg %p341
      $region46: #{tpu_custom_call.1} parent=5 // pred_check_branch
        %344 = sbr.rel (%p342) target = $region48
      $region47: #{tpu_custom_call.1} parent=5 // pred_region
        // Predicated region
        $region49: #{tpu_custom_call.1} parent=47 // pred_check
          %p345 = pneg %p46
        $region50: #{tpu_custom_call.1} parent=47 // pred_check_branch
          %347 = sbr.rel (%p345) target = $region52
        $region51: #{tpu_custom_call.1} parent=47 // pred_region
          %s348 = sand.u32 %s36, 1
          %s349 = scalar_lea.sflag [#allocation3], %s348
          %s350 = sand.u32 %s36, 1
          %s351 = smul.addr %s350, 8
          %s352 = scalar_lea.vmem [#allocation2], %s351
          %s354 = ssub.s32 128, 128
          %355 = vsyncadd %s349, %s354
          %s356 = smul.addr %s26, 128
          %s357 = scalar_lea.hbm %s0, %s356
          %s359 = sshll.u32 %s352, 4
          %s360 = int_to_ptr.vmem [resolvable:$true] %s359
          %362 = dma.hbm_to_vmem [thread:$0]  %s357, 128, %s360, %s349
        $region52: #{tpu_custom_call.1} parent=47 // pred_fallthru
          _
        // Predicated region
        $region53: #{tpu_custom_call.1} parent=47 // pred_check
          %p363 = pneg %p72
        $region54: #{tpu_custom_call.1} parent=47 // pred_check_branch
          %365 = sbr.rel (%p363) target = $region56
        $region55: #{tpu_custom_call.1} parent=47 // pred_region
          %s366 = sand.u32 %s26, 1
          %s367 = scalar_lea.sflag [#allocation6], %s366
          %s368 = sand.u32 %s62, 1
          %s369 = smul.addr %s368, 8
          %s370 = scalar_lea.vmem [#allocation5], %s369
          %s372 = ssub.s32 128, 128
          %373 = vsyncadd %s367, %s372
          %s374 = smul.addr %s26, 128
          %s375 = scalar_lea.hbm %s1, %s374
          %s377 = sshll.u32 %s370, 4
          %s378 = int_to_ptr.vmem [resolvable:$true] %s377
          %380 = dma.hbm_to_vmem [thread:$0]  %s375, 128, %s378, %s367
        $region56: #{tpu_custom_call.1} parent=47 // pred_fallthru
          _
      $region48: #{tpu_custom_call.1} parent=5 // pred_fallthru
        _
      %p381 = scmp.le.s32.totalorder 1, %s26
      %p382 = scmp.lt.s32.totalorder %s26, 3
      %p383 = pnand %p381, %p382
      %p384 = pneg %p383
      // Predicated region
      $region57: #{tpu_custom_call.1} parent=5 // pred_check
        _
      $region58: #{tpu_custom_call.1} parent=5 // pred_check_branch
        %386 = sbr.rel (%p383) target = $region60
      $region59: #{tpu_custom_call.1} parent=5 // pred_region
        %s387 = ssub.s32 %s26, 1
        %s388 = sand.u32 %s39, 1
        %s389 = scalar_lea.sflag [#allocation3], %s388
        %s390 = sand.u32 %s39, 1
        %s391 = smul.addr %s390, 8
        %s392 = scalar_lea.vmem [#allocation2], %s391
        // Predicated region
        $region61: #{tpu_custom_call.1} parent=59 // pred_check
          %p393 = pneg %p52
        $region62: #{tpu_custom_call.1} parent=59 // pred_check_branch
          %395 = sbr.rel (%p393) target = $region64
        $region63: #{tpu_custom_call.1} parent=59 // pred_region
          %396 = dma.done %s389, 128
        $region64: #{tpu_custom_call.1} parent=59 // pred_fallthru
          _
        %s397 = sand.u32 %s31, 1
        %s398 = scalar_lea.sflag [#allocation6], %s397
        %s399 = sand.u32 %s65, 1
        %s400 = smul.addr %s399, 8
        %s401 = scalar_lea.vmem [#allocation5], %s400
        // Predicated region
        $region65: #{tpu_custom_call.1} parent=59 // pred_check
          %p402 = pneg %p78
        $region66: #{tpu_custom_call.1} parent=59 // pred_check_branch
          %404 = sbr.rel (%p402) target = $region68
        $region67: #{tpu_custom_call.1} parent=59 // pred_region
          %405 = dma.done %s398, 128
        $region68: #{tpu_custom_call.1} parent=59 // pred_fallthru
          _
        // Predicated region
        $region69: #{tpu_custom_call.1} parent=59 // pred_check
          %p406 = pneg %p99
        $region70: #{tpu_custom_call.1} parent=59 // pred_check_branch
          %408 = sbr.rel (%p406) target = $region72
        $region71: #{tpu_custom_call.1} parent=59 // pred_region
          %409 = dma.done [#allocation6], 1024
        $region72: #{tpu_custom_call.1} parent=59 // pred_fallthru
          _
        // Predicated region
        $region73: #{tpu_custom_call.1} parent=59 // pred_check
          %p410 = pneg %p141
        $region74: #{tpu_custom_call.1} parent=59 // pred_check_branch
          %412 = sbr.rel (%p410) target = $region76
        $region75: #{tpu_custom_call.1} parent=59 // pred_region
          %413 = dma.done [#allocation9], 1024
        $region76: #{tpu_custom_call.1} parent=59 // pred_fallthru
          _
        // Predicated region
        $region77: #{tpu_custom_call.1} parent=59 // pred_check
          %p414 = pneg %p183
        $region78: #{tpu_custom_call.1} parent=59 // pred_check_branch
          %416 = sbr.rel (%p414) target = $region80
        $region79: #{tpu_custom_call.1} parent=59 // pred_region
          %417 = dma.done [#allocation9], 1024
        $region80: #{tpu_custom_call.1} parent=59 // pred_fallthru
          _
        %s418 = sand.u32 %s39, 1
        %s419 = scalar_lea.sflag [#allocation3], %s418
        %s420 = sand.u32 %s39, 1
        %s421 = smul.addr %s420, 8
        %s422 = scalar_lea.vmem [#allocation2], %s421
        %p423 = pneg %p52
        %p424 = pneg %p49
        %s425 = sand.u32 %s31, 1
        %s426 = scalar_lea.sflag [#allocation6], %s425
        %s427 = sand.u32 %s65, 1
        %s428 = smul.addr %s427, 8
        %s429 = scalar_lea.vmem [#allocation5], %s428
        %p430 = pneg %p78
        %p431 = pneg %p75
        %p432 = pneg %p99
        %p433 = pneg %p96
        %p434 = pneg %p120
        %p435 = pneg %p117
        %p436 = pneg %p141
        %p437 = pneg %p138
        %p438 = pneg %p162
        %p439 = pneg %p159
        %p440 = pneg %p183
        %p441 = pneg %p180
        %p442 = pneg %p204
        %p443 = pneg %p201
        %p444 = pneg %p225
        %p445 = pneg %p222
        %p446 = pneg %p246
        %p447 = pneg %p243
        %p448 = pneg %p272
        %p449 = pneg %p269
        %s450 = sand.u32 %s259, 1
        %s451 = scalar_lea.sflag [#allocation4], %s450
        %s452 = sand.u32 %s259, 1
        %s453 = smul.addr %s452, 8
        %s454 = scalar_lea.vmem [#allocation11], %s453
        %v456 = vld [vmem:[%s392] sm:$0xff]
        %v457 = vld [vmem:[%s401] sm:$0xff]
        %v458 = vadd.f32 %v456, %v457
        %v459 = vpack.c.bf16 %v458, %v458
        %v460 = vld [vmem:[#allocation7] sm:$0xf]
        %v461 = vld [vmem:[#allocation7 + $0x4] sm:$0xf]
        %v462 = vld [vmem:[#allocation7 + $0x8] sm:$0xf]
        %v463 = vld [vmem:[#allocation7 + $0xc] sm:$0xf]
        %v464 = vld [vmem:[#allocation7 + $0x10] sm:$0xf]
        %v465 = vld [vmem:[#allocation7 + $0x14] sm:$0xf]
        %v466 = vld [vmem:[#allocation7 + $0x18] sm:$0xf]
        %v467 = vld [vmem:[#allocation7 + $0x1c] sm:$0xf]
        %v468 = vld [vmem:[#allocation7 + $0x20] sm:$0xf]
        %v469 = vld [vmem:[#allocation7 + $0x24] sm:$0xf]
        %v470 = vld [vmem:[#allocation7 + $0x28] sm:$0xf]
        %v471 = vld [vmem:[#allocation7 + $0x2c] sm:$0xf]
        %v472 = vld [vmem:[#allocation7 + $0x30] sm:$0xf]
        %v473 = vld [vmem:[#allocation7 + $0x34] sm:$0xf]
        %v474 = vld [vmem:[#allocation7 + $0x38] sm:$0xf]
        %v475 = vld [vmem:[#allocation7 + $0x3c] sm:$0xf]
        %v476 = vld [vmem:[%s3] sm:$0x1]
        %v478 = vlaneseq
        %v479 = vshrl.u32 %v478, 7
        %v480 = vsub.s32 0, %v479
        %v481 = vrot.slane %v476, %v480
        %v499 = vunpack.c.l.b16 %v460
        %v500 = vunpack.c.l.b16 %v461
        %v501 = vunpack.c.l.b16 %v462
        %v502 = vunpack.c.l.b16 %v463
        %v503 = vunpack.c.l.b16 %v464
        %v504 = vunpack.c.l.b16 %v465
        %v505 = vunpack.c.l.b16 %v466
        %v506 = vunpack.c.l.b16 %v467
        %v507 = vunpack.c.l.b16 %v468
        %v508 = vunpack.c.l.b16 %v469
        %v509 = vunpack.c.l.b16 %v470
        %v510 = vunpack.c.l.b16 %v471
        %v511 = vunpack.c.l.b16 %v472
        %v512 = vunpack.c.l.b16 %v473
        %v513 = vunpack.c.l.b16 %v474
        %v514 = vunpack.c.l.b16 %v475
        %v515 = vpack.c.b16 %v500, %v499
        %v516 = vpack.c.b16 %v502, %v501
        %v517 = vpack.c.b16 %v504, %v503
        %v518 = vpack.c.b16 %v506, %v505
        %v519 = vpack.c.b16 %v508, %v507
        %v520 = vpack.c.b16 %v510, %v509
        %v521 = vpack.c.b16 %v512, %v511
        %v522 = vpack.c.b16 %v514, %v513
        %531 = vmatprep.subr.bf16.mxu0 0
        %532 = vmatpush1.bf16.msra.mxu0 %v515
        %533 = vmatprep.subr.bf16.mxu0 0
        %534 = vmatpush1.bf16.msra.mxu0 %v516
        %535 = vmatprep.subr.bf16.mxu0 0
        %536 = vmatpush1.bf16.msra.mxu0 %v517
        %537 = vmatprep.subr.bf16.mxu0 0
        %538 = vmatpush1.bf16.msra.mxu0 %v518
        %539 = vmatprep.subr.bf16.mxu0 0
        %540 = vmatpush1.bf16.msra.mxu0 %v519
        %541 = vmatprep.subr.bf16.mxu0 0
        %542 = vmatpush1.bf16.msra.mxu0 %v520
        %543 = vmatprep.subr.bf16.mxu0 0
        %544 = vmatpush1.bf16.msra.mxu0 %v521
        %545 = vmatprep.subr.bf16.mxu0 0
        %546 = vmatpush1.bf16.msra.mxu0 %v522
        %547 = vmatprep.subr.bf16.mxu0 0
        %548 = vmatpush1.bf16.msra.mxu0 0
        %549 = vmatprep.subr.bf16.mxu0 0
        %550 = vmatpush1.bf16.msra.mxu0 0
        %551 = vmatprep.subr.bf16.mxu0 0
        %552 = vmatpush1.bf16.msra.mxu0 0
        %553 = vmatprep.subr.bf16.mxu0 0
        %554 = vmatpush1.bf16.msra.mxu0 0
        %555 = vmatprep.subr.bf16.mxu0 0
        %556 = vmatpush1.bf16.msra.mxu0 0
        %557 = vmatprep.subr.bf16.mxu0 0
        %558 = vmatpush1.bf16.msra.mxu0 0
        %559 = vmatprep.subr.bf16.mxu0 0
        %560 = vmatpush1.bf16.msra.mxu0 0
        %561 = vmatprep.subr.bf16.mxu0 0
        %562 = vmatpush1.bf16.msra.mxu0 0
        %563 = vmatprep.mubr.bf16.mxu0 0
        %564 = vmatmul.mubr.bf16.gmra.mrb[0].mxu0 %v459
        %v565 = vpop.f32.mrb[0].mxu0
        %v566 = vadd.f32 %v481, %v565
        %v567 = vpop.f32.mrb[0].mxu0
        %v568 = vpop.f32.mrb[0].mxu0
        %v569 = vpop.f32.mrb[0].mxu0
        %570 = vdwg.mxu0
        %v571 = vpack.c.bf16 %v566, %v566
        %v572 = vld [vmem:[#allocation8] sm:$0xf]
        %v573 = vld [vmem:[#allocation8 + $0x4] sm:$0xf]
        %v574 = vld [vmem:[#allocation8 + $0x8] sm:$0xf]
        %v575 = vld [vmem:[#allocation8 + $0xc] sm:$0xf]
        %v576 = vld [vmem:[#allocation8 + $0x10] sm:$0xf]
        %v577 = vld [vmem:[#allocation8 + $0x14] sm:$0xf]
        %v578 = vld [vmem:[#allocation8 + $0x18] sm:$0xf]
        %v579 = vld [vmem:[#allocation8 + $0x1c] sm:$0xf]
        %v580 = vld [vmem:[#allocation8 + $0x20] sm:$0xf]
        %v581 = vld [vmem:[#allocation8 + $0x24] sm:$0xf]
        %v582 = vld [vmem:[#allocation8 + $0x28] sm:$0xf]
        %v583 = vld [vmem:[#allocation8 + $0x2c] sm:$0xf]
        %v584 = vld [vmem:[#allocation8 + $0x30] sm:$0xf]
        %v585 = vld [vmem:[#allocation8 + $0x34] sm:$0xf]
        %v586 = vld [vmem:[#allocation8 + $0x38] sm:$0xf]
        %v587 = vld [vmem:[#allocation8 + $0x3c] sm:$0xf]
        %v588 = vld [vmem:[%s5] sm:$0x1]
        %v590 = vlaneseq
        %v591 = vshrl.u32 %v590, 7
        %v592 = vsub.s32 0, %v591
        %v593 = vrot.slane %v588, %v592
        %v611 = vunpack.c.l.b16 %v572
        %v612 = vunpack.c.l.b16 %v573
        %v613 = vunpack.c.l.b16 %v574
        %v614 = vunpack.c.l.b16 %v575
        %v615 = vunpack.c.l.b16 %v576
        %v616 = vunpack.c.l.b16 %v577
        %v617 = vunpack.c.l.b16 %v578
        %v618 = vunpack.c.l.b16 %v579
        %v619 = vunpack.c.l.b16 %v580
        %v620 = vunpack.c.l.b16 %v581
        %v621 = vunpack.c.l.b16 %v582
        %v622 = vunpack.c.l.b16 %v583
        %v623 = vunpack.c.l.b16 %v584
        %v624 = vunpack.c.l.b16 %v585
        %v625 = vunpack.c.l.b16 %v586
        %v626 = vunpack.c.l.b16 %v587
        %v627 = vpack.c.b16 %v612, %v611
        %v628 = vpack.c.b16 %v614, %v613
        %v629 = vpack.c.b16 %v616, %v615
        %v630 = vpack.c.b16 %v618, %v617
        %v631 = vpack.c.b16 %v620, %v619
        %v632 = vpack.c.b16 %v622, %v621
        %v633 = vpack.c.b16 %v624, %v623
        %v634 = vpack.c.b16 %v626, %v625
        %643 = vmatprep.subr.bf16.mxu0 0
        %644 = vmatpush1.bf16.msra.mxu0 %v627
        %645 = vmatprep.subr.bf16.mxu0 0
        %646 = vmatpush1.bf16.msra.mxu0 %v628
        %647 = vmatprep.subr.bf16.mxu0 0
        %648 = vmatpush1.bf16.msra.mxu0 %v629
        %649 = vmatprep.subr.bf16.mxu0 0
        %650 = vmatpush1.bf16.msra.mxu0 %v630
        %651 = vmatprep.subr.bf16.mxu0 0
        %652 = vmatpush1.bf16.msra.mxu0 %v631
        %653 = vmatprep.subr.bf16.mxu0 0
        %654 = vmatpush1.bf16.msra.mxu0 %v632
        %655 = vmatprep.subr.bf16.mxu0 0
        %656 = vmatpush1.bf16.msra.mxu0 %v633
        %657 = vmatprep.subr.bf16.mxu0 0
        %658 = vmatpush1.bf16.msra.mxu0 %v634
        %659 = vmatprep.subr.bf16.mxu0 0
        %660 = vmatpush1.bf16.msra.mxu0 0
        %661 = vmatprep.subr.bf16.mxu0 0
        %662 = vmatpush1.bf16.msra.mxu0 0
        %663 = vmatprep.subr.bf16.mxu0 0
        %664 = vmatpush1.bf16.msra.mxu0 0
        %665 = vmatprep.subr.bf16.mxu0 0
        %666 = vmatpush1.bf16.msra.mxu0 0
        %667 = vmatprep.subr.bf16.mxu0 0
        %668 = vmatpush1.bf16.msra.mxu0 0
        %669 = vmatprep.subr.bf16.mxu0 0
        %670 = vmatpush1.bf16.msra.mxu0 0
        %671 = vmatprep.subr.bf16.mxu0 0
        %672 = vmatpush1.bf16.msra.mxu0 0
        %673 = vmatprep.subr.bf16.mxu0 0
        %674 = vmatpush1.bf16.msra.mxu0 0
        %675 = vmatprep.mubr.bf16.mxu0 0
        %676 = vmatmul.mubr.bf16.gmra.mrb[0].mxu0 %v571
        %v677 = vpop.f32.mrb[0].mxu0
        %v678 = vadd.f32 %v593, %v677
        %v679 = vpop.f32.mrb[0].mxu0
        %v680 = vpop.f32.mrb[0].mxu0
        %v681 = vpop.f32.mrb[0].mxu0
        %682 = vdwg.mxu0
        %v683 = vmul.f32 %v678, 0.5
        %v684 = vrcp.pop 1.4142135
        %v685 = vmul.f32 %v678, %v684
        %v686 = verf.f32.pop %v685
        %v687 = vadd.f32 %v686, 1.0
        %v688 = vmul.f32 %v683, %v687
        %v689 = vpack.c.bf16 %v688, %v688
        %v690 = vld [vmem:[#allocation10] sm:$0xf]
        %v691 = vld [vmem:[#allocation10 + $0x4] sm:$0xf]
        %v692 = vld [vmem:[#allocation10 + $0x8] sm:$0xf]
        %v693 = vld [vmem:[#allocation10 + $0xc] sm:$0xf]
        %v694 = vld [vmem:[#allocation10 + $0x10] sm:$0xf]
        %v695 = vld [vmem:[#allocation10 + $0x14] sm:$0xf]
        %v696 = vld [vmem:[#allocation10 + $0x18] sm:$0xf]
        %v697 = vld [vmem:[#allocation10 + $0x1c] sm:$0xf]
        %v698 = vld [vmem:[#allocation10 + $0x20] sm:$0xf]
        %v699 = vld [vmem:[#allocation10 + $0x24] sm:$0xf]
        %v700 = vld [vmem:[#allocation10 + $0x28] sm:$0xf]
        %v701 = vld [vmem:[#allocation10 + $0x2c] sm:$0xf]
        %v702 = vld [vmem:[#allocation10 + $0x30] sm:$0xf]
        %v703 = vld [vmem:[#allocation10 + $0x34] sm:$0xf]
        %v704 = vld [vmem:[#allocation10 + $0x38] sm:$0xf]
        %v705 = vld [vmem:[#allocation10 + $0x3c] sm:$0xf]
        %v706 = vld [vmem:[%s7] sm:$0x1]
        %v708 = vlaneseq
        %v709 = vshrl.u32 %v708, 7
        %v710 = vsub.s32 0, %v709
        %v711 = vrot.slane %v706, %v710
        %v729 = vunpack.c.l.b16 %v690
        %v730 = vunpack.c.l.b16 %v691
        %v731 = vunpack.c.l.b16 %v692
        %v732 = vunpack.c.l.b16 %v693
        %v733 = vunpack.c.l.b16 %v694
        %v734 = vunpack.c.l.b16 %v695
        %v735 = vunpack.c.l.b16 %v696
        %v736 = vunpack.c.l.b16 %v697
        %v737 = vunpack.c.l.b16 %v698
        %v738 = vunpack.c.l.b16 %v699
        %v739 = vunpack.c.l.b16 %v700
        %v740 = vunpack.c.l.b16 %v701
        %v741 = vunpack.c.l.b16 %v702
        %v742 = vunpack.c.l.b16 %v703
        %v743 = vunpack.c.l.b16 %v704
        %v744 = vunpack.c.l.b16 %v705
        %v745 = vpack.c.b16 %v730, %v729
        %v746 = vpack.c.b16 %v732, %v731
        %v747 = vpack.c.b16 %v734, %v733
        %v748 = vpack.c.b16 %v736, %v735
        %v749 = vpack.c.b16 %v738, %v737
        %v750 = vpack.c.b16 %v740, %v739
        %v751 = vpack.c.b16 %v742, %v741
        %v752 = vpack.c.b16 %v744, %v743
        %761 = vmatprep.subr.bf16.mxu0 0
        %762 = vmatpush1.bf16.msra.mxu0 %v745
        %763 = vmatprep.subr.bf16.mxu0 0
        %764 = vmatpush1.bf16.msra.mxu0 %v746
        %765 = vmatprep.subr.bf16.mxu0 0
        %766 = vmatpush1.bf16.msra.mxu0 %v747
        %767 = vmatprep.subr.bf16.mxu0 0
        %768 = vmatpush1.bf16.msra.mxu0 %v748
        %769 = vmatprep.subr.bf16.mxu0 0
        %770 = vmatpush1.bf16.msra.mxu0 %v749
        %771 = vmatprep.subr.bf16.mxu0 0
        %772 = vmatpush1.bf16.msra.mxu0 %v750
        %773 = vmatprep.subr.bf16.mxu0 0
        %774 = vmatpush1.bf16.msra.mxu0 %v751
        %775 = vmatprep.subr.bf16.mxu0 0
        %776 = vmatpush1.bf16.msra.mxu0 %v752
        %777 = vmatprep.subr.bf16.mxu0 0
        %778 = vmatpush1.bf16.msra.mxu0 0
        %779 = vmatprep.subr.bf16.mxu0 0
        %780 = vmatpush1.bf16.msra.mxu0 0
        %781 = vmatprep.subr.bf16.mxu0 0
        %782 = vmatpush1.bf16.msra.mxu0 0
        %783 = vmatprep.subr.bf16.mxu0 0
        %784 = vmatpush1.bf16.msra.mxu0 0
        %785 = vmatprep.subr.bf16.mxu0 0
        %786 = vmatpush1.bf16.msra.mxu0 0
        %787 = vmatprep.subr.bf16.mxu0 0
        %788 = vmatpush1.bf16.msra.mxu0 0
        %789 = vmatprep.subr.bf16.mxu0 0
        %790 = vmatpush1.bf16.msra.mxu0 0
        %791 = vmatprep.subr.bf16.mxu0 0
        %792 = vmatpush1.bf16.msra.mxu0 0
        %793 = vmatprep.mubr.bf16.mxu0 0
        %794 = vmatmul.mubr.bf16.gmra.mrb[0].mxu0 %v689
        %v795 = vpop.f32.mrb[0].mxu0
        %v796 = vadd.f32 %v711, %v795
        %v797 = vpop.f32.mrb[0].mxu0
        %v798 = vpop.f32.mrb[0].mxu0
        %v799 = vpop.f32.mrb[0].mxu0
        %800 = vdwg.mxu0
        %v801 = vadd.f32 %v566, %v796
        %v802 = vlaneseq
        %v803 = vand.u32 %v802, 127
        %vm804 = vcmp.lt.s32.totalorder %v803, 32
        %v805 = vsel %vm804, %v801, 0.0
        %806 = vadd.xlane.f32.xlu0 %v805
        %v807 = vpop.xlane.xlu0 %806
        %v808 = vmul.f32 %v807, 0.03125
        %v809 = vsub.f32 %v805, %v808
        %v810 = vsel %vm804, %v809, 0.0
        %v811 = vmul.f32 %v810, %v810
        %812 = vadd.xlane.f32.xlu0 %v811
        %v813 = vpop.xlane.xlu0 %812
        %v814 = vmul.f32 %v813, 0.03125
        %v815 = vadd.f32 %v814, 1e-05
        %v816 = vrsqrt.pop %v815
        %v817 = vmul.f32 %v810, %v816
        %v818 = vld [vmem:[%s8] sm:$0x1]
        %v820 = vlaneseq
        %v821 = vshrl.u32 %v820, 7
        %v822 = vsub.s32 0, %v821
        %v823 = vrot.slane %v818, %v822
        %v825 = vmul.f32 %v817, %v823
        %v826 = vld [vmem:[%s9] sm:$0x1]
        %v828 = vlaneseq
        %v829 = vshrl.u32 %v828, 7
        %v830 = vsub.s32 0, %v829
        %v831 = vrot.slane %v826, %v830
        %v833 = vadd.f32 %v825, %v831
        %834 = vst [vmem:[%s454] sm:$0xff] %v833
        %s835 = sand.u32 %s259, 1
        %s836 = scalar_lea.sflag [#allocation4], %s835
        %s837 = sand.u32 %s259, 1
        %s838 = smul.addr %s837, 8
        %s839 = scalar_lea.vmem [#allocation11], %s838
        // Predicated region
        $region81: #{tpu_custom_call.1} parent=59 // pred_check
          %p840 = pneg %p269
        $region82: #{tpu_custom_call.1} parent=59 // pred_check_branch
          %842 = sbr.rel (%p840) target = $region84
        $region83: #{tpu_custom_call.1} parent=59 // pred_region
          %s844 = ssub.s32 128, 128
          %845 = vsyncadd %s836, %s844
          %s846 = smul.addr %s31, 128
          %s847 = scalar_lea.hbm %s10, %s846
          %s849 = sshll.u32 %s839, 4
          %s850 = int_to_ptr.vmem [resolvable:$true] %s849
          %852 = dma.vmem_to_hbm [thread:$0]  %s850, 128, %s847, %s836
        $region84: #{tpu_custom_call.1} parent=59 // pred_fallthru
          _
      $region60: #{tpu_custom_call.1} parent=5 // pred_fallthru
        _
      %p853 = scmp.le.s32.totalorder 2, %s26
      // Predicated region
      $region85: #{tpu_custom_call.1} parent=5 // pred_check
        %p854 = pneg %p853
      $region86: #{tpu_custom_call.1} parent=5 // pred_check_branch
        %856 = sbr.rel (%p854) target = $region88
      $region87: #{tpu_custom_call.1} parent=5 // pred_region
        %s857 = ssub.s32 %s26, 2
        // Predicated region
        $region89: #{tpu_custom_call.1} parent=87 // pred_check
          %p858 = pneg %p275
        $region90: #{tpu_custom_call.1} parent=87 // pred_check_branch
          %860 = sbr.rel (%p858) target = $region92
        $region91: #{tpu_custom_call.1} parent=87 // pred_region
          %s861 = sand.u32 %s260, 1
          %s862 = scalar_lea.sflag [#allocation4], %s861
          %s863 = sand.u32 %s260, 1
          %s864 = smul.addr %s863, 8
          %s865 = scalar_lea.vmem [#allocation11], %s864
          %866 = dma.done %s862, 128
        $region92: #{tpu_custom_call.1} parent=87 // pred_fallthru
          _
      $region88: #{tpu_custom_call.1} parent=5 // pred_fallthru
        _
    $region6: #{tpu_custom_call.1} parent=1 // loop_footer
      %s30 = sadd.s32 1, %s26
    $region7: #{tpu_custom_call.1} parent=1 // loop_footer_branch
      %25 = sbr.rel target = $region3
    $region8: #{tpu_custom_call.1} parent=1 // loop_exit
      _
    %867 = vsyncpa [#allocation3], 1
    %s868 = scalar_lea.sflag [#allocation3], 1
    %869 = vsyncpa %s868, 1
    %870 = vsyncpa [#allocation6], 1
    %s871 = scalar_lea.sflag [#allocation6], 1
    %872 = vsyncpa %s871, 1
    %873 = vsyncpa [#allocation9], 1
    %874 = vsyncpa [#allocation4], 1
    %s875 = scalar_lea.sflag [#allocation4], 1
    %876 = vsyncpa %s875, 1

</llo_original>
